<compile_context>
chip_gen: v7x
topology: tpu7x:2x2x1
jax: 0.10.0
libtpu: 0.0.40
codegen_flags: <defaults>
</compile_context>

<pallas_src>
import functools

import jax
import jax.numpy as jnp
from jax import lax
from jax.experimental import pallas as pl
from jax.experimental.pallas import tpu as pltpu

LANES = 128
MAX_BLOCK_ROWS = 8192   # 8192x128 f32 = 4 MiB per input per pipeline buffer
SPLIT_ROWS = 2048       # above this, force >= 2 grid steps (v7x dual-TC sharding)

ALPHA = 0.8
GAMMA = 2.0


def _round_up(x, m):
    return ((x + m - 1) // m) * m


def _sublane_multiple(dtype):
    # f32 -> 8 rows, bf16/f16 -> 16, int8/bool/fp8 -> 32 (packed sublane tiling).
    itemsize = jnp.dtype(dtype).itemsize
    return max(8, (8 * 4) // max(1, itemsize))


def _fold_to_sublane(a, block_rows):
    # (block_rows, 128) -> (8, 128) partial sum.  The reshape is
    # layout-preserving and the leading-axis sum lowers to vreg-vreg VPU adds
    # (no XLU scalar reduction per grid step).
    return jnp.sum(a.reshape(block_rows // 8, 8, LANES), axis=0)


def _focal_bce_partial_kernel(x_ref, t_ref, o_ref, *, block_rows, last_block_rows):
    """Per-tile BCE-with-logits, folded to an (8, 128) partial sum."""
    x = x_ref[...].astype(jnp.float32)   # cast in-kernel (free VALU work)
    t = t_ref[...].astype(jnp.float32)

    # Numerically-stable equivalent of
    #   p = sigmoid(x); bce = -(t*log(p) + (1-t)*log(1-p))
    # including PyTorch's clamp of each log term at -100.
    sp = jnp.maximum(x, 0.0) + jnp.log1p(jnp.exp(-jnp.abs(x)))  # softplus(x)
    log_p = jnp.maximum(x - sp, -100.0)      # log(sigmoid(x))
    log_1mp = jnp.maximum(-sp, -100.0)       # log(1 - sigmoid(x))
    bce = -(t * log_p + (1.0 - t) * log_1mp)

    if last_block_rows == block_rows:
        # Every block is full: alignment padding already contributes ~0 via the
        # sentinel values, so no masking at all in the hot loop.
        o_ref[...] = _fold_to_sublane(bce, block_rows)[None]
    else:
        # Only the final (ragged) block carries out-of-bounds rows; gate the
        # row mask so every other grid step stays mask-free.
        is_last = pl.program_id(0) == pl.num_programs(0) - 1

        @pl.when(jnp.logical_not(is_last))
        def _():
            o_ref[...] = _fold_to_sublane(bce, block_rows)[None]

        @pl.when(is_last)
        def _():
            # Row-index compare (int32-safe: rows fit easily, unlike a flat
            # element index which could overflow for >= 2^31 elements).
            row = lax.broadcasted_iota(jnp.int32, bce.shape, 0)
            masked = jnp.where(row < last_block_rows, bce, 0.0)
            o_ref[...] = _fold_to_sublane(masked, block_rows)[None]


def focal_loss(inputs, targets, alpha=ALPHA, gamma=GAMMA, smooth=1):
    """Pallas TPU implementation of FocalLoss.forward (returns a scalar f32).

    Targets may be supplied in a narrow dtype (bf16 / int8 / bool) -- they are
    cast in-kernel, which cuts HBM traffic for this bandwidth-bound kernel.
    """
    del smooth  # present in the reference signature but unused by the forward
    x = jnp.ravel(inputs)    # keep native dtype; no wrapper-side astype
    t = jnp.ravel(targets)
    n = x.shape[0]

    # Pad only to the minimal lane/sublane alignment (NOT to a full block).
    # Sentinel values (x = -100, t = 0) make each padded element's BCE ~ 0, so
    # the alignment tail needs no in-kernel mask.  For typical shapes the pad
    # is zero and no copy happens at all.
    row_align = max(_sublane_multiple(x.dtype), _sublane_multiple(t.dtype))
    rows = pl.cdiv(n, LANES)
    padded_rows = _round_up(rows, row_align)
    padded_n = padded_rows * LANES
    pad = padded_n - n
    if pad > 0:
        x = jnp.pad(x, (0, pad), constant_values=-100)
        t = jnp.pad(t, (0, pad), constant_values=0)
    x2 = x.reshape(padded_rows, LANES)
    t2 = t.reshape(padded_rows, LANES)

    # Block selection: as large as possible (amortize per-step pipeline
    # overhead), but keep >= 2 grid steps for inputs big enough to benefit
    # from dual-TensorCore sharding on v7x.
    if padded_rows <= SPLIT_ROWS:
        block_rows = padded_rows
    else:
        block_rows = min(MAX_BLOCK_ROWS,
                         _round_up(pl.cdiv(padded_rows, 2), row_align))
    num_blocks = pl.cdiv(padded_rows, block_rows)
    last_block_rows = padded_rows - (num_blocks - 1) * block_rows

    kernel = functools.partial(
        _focal_bce_partial_kernel,
        block_rows=block_rows,
        last_block_rows=last_block_rows,
    )

    # Double-buffered inputs + headroom for the (tiny) output and internals.
    in_bytes_per_step = block_rows * LANES * (x2.dtype.itemsize
                                              + t2.dtype.itemsize)
    vmem_limit = max(2 * in_bytes_per_step + (8 << 20), 16 << 20)

    cost = pl.CostEstimate(
        flops=12 * padded_n,
        transcendentals=2 * padded_n,
        bytes_accessed=(x2.size * x2.dtype.itemsize
                        + t2.size * t2.dtype.itemsize
                        + num_blocks * 8 * LANES * 4),
    )

    partials = pl.pallas_call(
        kernel,
        out_shape=jax.ShapeDtypeStruct((num_blocks, 8, LANES), jnp.float32),
        grid_spec=pltpu.PrefetchScalarGridSpec(
            num_scalar_prefetch=0,
            grid=(num_blocks,),
            in_specs=[
                pl.BlockSpec((block_rows, LANES), lambda i: (i, 0)),
                pl.BlockSpec((block_rows, LANES), lambda i: (i, 0)),
            ],
            out_specs=pl.BlockSpec((1, 8, LANES), lambda i: (i, 0, 0)),
        ),
        compiler_params=pltpu.CompilerParams(
            dimension_semantics=("parallel",),
            vmem_limit_bytes=vmem_limit,
        ),
        cost_estimate=cost,
    )(x2, t2)

    # Tiny scalar epilogue on the reduced partials (mean + focal transform).
    bce_mean = jnp.sum(partials) / jnp.float32(n)
    bce_exp = jnp.exp(-bce_mean)
    return alpha * (1.0 - bce_exp) ** gamma * bce_mean


def focal_loss_ref(inputs, targets, alpha=ALPHA, gamma=GAMMA):
    """Pure-JAX mirror of the PyTorch FocalLoss.forward."""
    p = jax.nn.sigmoid(jnp.ravel(inputs).astype(jnp.float32))
    t = jnp.ravel(targets).astype(jnp.float32)
    log_p = jnp.maximum(jnp.log(p), -100.0)
    log_1mp = jnp.maximum(jnp.log(1.0 - p), -100.0)
    bce = jnp.mean(-(t * log_p + (1.0 - t) * log_1mp))
    bce_exp = jnp.exp(-bce)
    return alpha * (1.0 - bce_exp) ** gamma * bce


if __name__ == "__main__":
    key = jax.random.PRNGKey(0)
    k1, k2 = jax.random.split(key)
    # NCHW-style segmentation logits and binary targets (small shapes).
    x = jax.random.normal(k1, (2, 4, 16, 16), dtype=jnp.float32)
    y = (jax.random.uniform(k2, (2, 4, 16, 16)) > 0.5).astype(jnp.float32)

    loss = focal_loss(x, y)
    jax.block_until_ready(loss)

    ref = focal_loss_ref(x, y)
    assert jnp.allclose(loss, ref, atol=1e-5, rtol=1e-5), (loss, ref)

    # Exercise the ragged-last-block path (n not a multiple of block_rows*128).
    k3, k4 = jax.random.split(k2)
    x_big = jax.random.normal(k3, (3, 5, 23, 17), dtype=jnp.float32)
    y_big = (jax.random.uniform(k4, (3, 5, 23, 17)) > 0.5).astype(jnp.float32)
    loss_big = focal_loss(x_big, y_big)
    jax.block_until_ready(loss_big)
    ref_big = focal_loss_ref(x_big, y_big)
    assert jnp.allclose(loss_big, ref_big, atol=1e-5, rtol=1e-5), (loss_big, ref_big)

    print("KERNEL_OK")
</pallas_src>

<mosaic_0001>
module attributes {stable_mosaic.version = 11 : i64} {
  func.func @_focal_bce_partial_kernel(%arg0: i32, %arg1: memref<16x128xf32, #tpu.memory_space<vmem>>, %arg2: memref<16x128xf32, #tpu.memory_space<vmem>>, %arg3: memref<1x8x128xf32, #tpu.memory_space<vmem>>) attributes {dimension_semantics = [#tpu.dimension_semantics<parallel>], iteration_bounds = array<i64: 1>, scalar_prefetch = 0 : i64, scratch_operands = 0 : i64, tpu.core_type = #tpu.core_type<tc>, window_params = [{transform_indices = @transform_0, window_bounds = array<i64: 16, 128>}, {transform_indices = @transform_1, window_bounds = array<i64: 16, 128>}, {transform_indices = @transform_2, window_bounds = array<i64: 1, 8, 128>}]} {
    %c0 = arith.constant 0 : index
    %c0_0 = arith.constant 0 : index
    %0 = vector.load %arg1[%c0, %c0_0] : memref<16x128xf32, #tpu.memory_space<vmem>>, vector<16x128xf32>
    %c0_1 = arith.constant 0 : index
    %c0_2 = arith.constant 0 : index
    %1 = vector.load %arg2[%c0_1, %c0_2] : memref<16x128xf32, #tpu.memory_space<vmem>>, vector<16x128xf32>
    %cst = arith.constant 0.000000e+00 : f32
    %2 = vector.broadcast %cst : f32 to vector<16x128xf32>
    %3 = arith.maximumf %0, %2 : vector<16x128xf32>
    %4 = math.absf %0 : vector<16x128xf32>
    %cst_3 = arith.constant 0.000000e+00 : f32
    %5 = vector.broadcast %cst_3 : f32 to vector<16x128xf32>
    %6 = arith.subf %5, %4 : vector<16x128xf32>
    %7 = math.exp %6 : vector<16x128xf32>
    %8 = math.log1p %7 : vector<16x128xf32>
    %9 = arith.addf %3, %8 : vector<16x128xf32>
    %10 = arith.subf %0, %9 : vector<16x128xf32>
    %cst_4 = arith.constant -1.000000e+02 : f32
    %11 = vector.broadcast %cst_4 : f32 to vector<16x128xf32>
    %12 = arith.maximumf %10, %11 : vector<16x128xf32>
    %cst_5 = arith.constant 0.000000e+00 : f32
    %13 = vector.broadcast %cst_5 : f32 to vector<16x128xf32>
    %14 = arith.subf %13, %9 : vector<16x128xf32>
    %cst_6 = arith.constant -1.000000e+02 : f32
    %15 = vector.broadcast %cst_6 : f32 to vector<16x128xf32>
    %16 = arith.maximumf %14, %15 : vector<16x128xf32>
    %17 = arith.mulf %1, %12 : vector<16x128xf32>
    %cst_7 = arith.constant 1.000000e+00 : f32
    %18 = vector.broadcast %cst_7 : f32 to vector<16x128xf32>
    %19 = arith.subf %18, %1 : vector<16x128xf32>
    %20 = arith.mulf %19, %16 : vector<16x128xf32>
    %21 = arith.addf %17, %20 : vector<16x128xf32>
    %cst_8 = arith.constant 0.000000e+00 : f32
    %22 = vector.broadcast %cst_8 : f32 to vector<16x128xf32>
    %23 = arith.subf %22, %21 : vector<16x128xf32>
    %24 = vector.shape_cast %23 : vector<16x128xf32> to vector<2x8x128xf32>
    %cst_9 = arith.constant dense<0.000000e+00> : vector<8x128xf32>
    %25 = vector.multi_reduction <add>, %24, %cst_9 [0] : vector<2x8x128xf32> to vector<8x128xf32>
    %26 = vector.shape_cast %25 : vector<8x128xf32> to vector<1x8x128xf32>
    %c0_10 = arith.constant 0 : index
    %c0_11 = arith.constant 0 : index
    %c0_12 = arith.constant 0 : index
    %27 = vector.load %arg3[%c0_10, %c0_11, %c0_12] : memref<1x8x128xf32, #tpu.memory_space<vmem>>, vector<1x8x128xf32>
    tpu.vector_store %arg3[%c0_10, %c0_11, %c0_12], %26 {strides = array<i32>} : memref<1x8x128xf32, #tpu.memory_space<vmem>>, vector<1x8x128xf32>,
    return
  }
  func.func @transform_0(%arg0: i32) -> (i32, i32) {
    %c0_i32 = arith.constant 0 : i32
    %c0_i32_0 = arith.constant 0 : i32
    return %arg0, %c0_i32 : i32, i32
  }
  func.func @transform_1(%arg0: i32) -> (i32, i32) {
    %c0_i32 = arith.constant 0 : i32
    %c0_i32_0 = arith.constant 0 : i32
    return %arg0, %c0_i32 : i32, i32
  }
  func.func @transform_2(%arg0: i32) -> (i32, i32, i32) {
    %c0_i32 = arith.constant 0 : i32
    %c0_i32_0 = arith.constant 0 : i32
    %c0_i32_1 = arith.constant 0 : i32
    return %arg0, %c0_i32, %c0_i32_0 : i32, i32, i32
  }
}

</mosaic_0001>

<llo_original>
// kernel: tpu_custom_call.1
$region0: #{tpu_custom_call.1}
  #allocation0 [shape = 'u32[]', space=smem, size = 0x4, offset = 0x4, fixed_abs, tag = 'smem constant byte address 0x4 - core index']
  #allocation1 [shape = 'u32[144,128]{1,0:T(1,128)}', space=vmem, size = 0x12000, scoped, tag = 'internal scratch']
  %s0 = inlined_call_operand.hbm [shape: f32[16,128], index: 0, kind: input, shape index: {}]
  %s1 = inlined_call_operand.hbm [shape: f32[16,128], index: 1, kind: input, shape index: {}]
  %s2 = inlined_call_operand.hbm [shape: f32[1,8,128], index: 2, kind: output, shape index: {}]
  %s3 = sld [smem:[#allocation0]]
  $region26: #{tpu_custom_call.1} parent=0
    _
  %s5 = ssub.s32 1, %s3
  %s6 = scalar_select 0, %s5, %s3
  $region1: #{tpu_custom_call.1} parent=0
    #allocation2 [shape = 'u8[8192]{0}', space=vmem, size = 0x2000, scoped, tag = 'input window, operand 0, single buffered']
    #allocation3 [shape = 's32[1]{0}', space=sflag, size = 0x4, scoped, tag = 'scoped memory for tpu_custom_call.1']
    #allocation4 [shape = 's32[1]{0}', space=sflag, size = 0x4, scoped, tag = 'scoped memory for tpu_custom_call.1']
    #allocation5 [shape = 'u8[8192]{0}', space=vmem, size = 0x2000, scoped, tag = 'input window, operand 1, single buffered']
    #allocation6 [shape = 's32[1]{0}', space=sflag, size = 0x4, scoped, tag = 'scoped memory for tpu_custom_call.1']
    #allocation7 [shape = 'u8[4096]{0}', space=vmem, size = 0x1000, scoped, tag = 'output window, operand 0, single buffered']
    %7 = vsyncpa [#allocation3], 0
    %8 = vsyncpa [#allocation6], 0
    %9 = vsyncpa [#allocation4], 0
    // Predicated region
    $region2: #{tpu_custom_call.1} parent=1 // pred_check
      _
    $region3: #{tpu_custom_call.1} parent=1 // pred_check_branch
      %11 = sbr.rel (0) target = $region5
    $region4: #{tpu_custom_call.1} parent=1 // pred_region
      %s13 = ssub.s32 256, 256
      %14 = vsyncadd [#allocation3], %s13
      %s15 = sshll.u32 [#allocation2], 4
      %s16 = int_to_ptr.vmem [resolvable:$true] %s15
      %21 = dma.hbm_to_vmem [thread:$0]  %s0, 256, %s16, [#allocation3], 128, 128, 8
    $region5: #{tpu_custom_call.1} parent=1 // pred_fallthru
      _
    // Predicated region
    $region6: #{tpu_custom_call.1} parent=1 // pred_check
      _
    $region7: #{tpu_custom_call.1} parent=1 // pred_check_branch
      %23 = sbr.rel (0) target = $region9
    $region8: #{tpu_custom_call.1} parent=1 // pred_region
      %s25 = ssub.s32 256, 256
      %26 = vsyncadd [#allocation6], %s25
      %s27 = sshll.u32 [#allocation5], 4
      %s28 = int_to_ptr.vmem [resolvable:$true] %s27
      %33 = dma.hbm_to_vmem [thread:$0]  %s1, 256, %s28, [#allocation6], 128, 128, 8
    $region9: #{tpu_custom_call.1} parent=1 // pred_fallthru
      _
    // Predicated region
    $region10: #{tpu_custom_call.1} parent=1 // pred_check
      _
    $region11: #{tpu_custom_call.1} parent=1 // pred_check_branch
      %35 = sbr.rel (0) target = $region13
    $region12: #{tpu_custom_call.1} parent=1 // pred_region
      %36 = dma.done [#allocation3], 256
    $region13: #{tpu_custom_call.1} parent=1 // pred_fallthru
      _
    // Predicated region
    $region14: #{tpu_custom_call.1} parent=1 // pred_check
      _
    $region15: #{tpu_custom_call.1} parent=1 // pred_check_branch
      %38 = sbr.rel (0) target = $region17
    $region16: #{tpu_custom_call.1} parent=1 // pred_region
      %39 = dma.done [#allocation6], 256
    $region17: #{tpu_custom_call.1} parent=1 // pred_fallthru
      _
    %v40 = vld [vmem:[#allocation2] sm:$0xff]
    %v41 = vld [vmem:[#allocation2 + $0x8] sm:$0xff]
    %v42 = vld [vmem:[#allocation5] sm:$0xff]
    %v43 = vld [vmem:[#allocation5 + $0x8] sm:$0xff]
    %v44 = vmax.f32 %v40, 0.0
    %v45 = vmax.f32 %v41, 0.0
    %v46 = vand.u32 2147483647, %v40
    %v47 = vand.u32 2147483647, %v41
    %v48 = vsub.f32 0.0, %v46
    %v49 = vsub.f32 0.0, %v47
    %v50 = vmul.f32 %v48, 1.442695
    %v51 = vpow.pop %v50
    %v52 = vmul.f32 %v49, 1.442695
    %v53 = vpow.pop %v52
    %v54 = vadd.f32 %v51, 1.0
    %v55 = vlog2.pop %v54
    %v56 = vmul.f32 %v55, 0.6931472
    %v57 = vmul.f32 -0.5, %v51
    %v58 = vadd.f32 %v57, 1.0
    %v59 = vmul.f32 %v58, %v51
    %v60 = vand.u32 2147483647, %v51
    %vm61 = vcmp.lt.f32.partialorder %v60, 0.0004427343
    %v62 = vsel %vm61, %v59, %v56
    %v63 = vadd.f32 %v53, 1.0
    %v64 = vlog2.pop %v63
    %v65 = vmul.f32 %v64, 0.6931472
    %v66 = vmul.f32 -0.5, %v53
    %v67 = vadd.f32 %v66, 1.0
    %v68 = vmul.f32 %v67, %v53
    %v69 = vand.u32 2147483647, %v53
    %vm70 = vcmp.lt.f32.partialorder %v69, 0.0004427343
    %v71 = vsel %vm70, %v68, %v65
    %v72 = vadd.f32 %v44, %v62
    %v73 = vadd.f32 %v45, %v71
    %v74 = vsub.f32 %v40, %v72
    %v75 = vsub.f32 %v41, %v73
    %v76 = vmax.f32 %v74, -100.0
    %v77 = vmax.f32 %v75, -100.0
    %v78 = vsub.f32 0.0, %v72
    %v79 = vsub.f32 0.0, %v73
    %v80 = vmax.f32 %v78, -100.0
    %v81 = vmax.f32 %v79, -100.0
    %v82 = vmul.f32 %v42, %v76
    %v83 = vmul.f32 %v43, %v77
    %v84 = vsub.f32 1.0, %v42
    %v85 = vsub.f32 1.0, %v43
    %v86 = vmul.f32 %v84, %v80
    %v87 = vmul.f32 %v85, %v81
    %v88 = vadd.f32 %v82, %v86
    %v89 = vadd.f32 %v83, %v87
    %v90 = vsub.f32 0.0, %v88
    %v91 = vsub.f32 0.0, %v89
    %v92 = vadd.f32 %v90, %v91
    %93 = vst [vmem:[#allocation7] sm:$0xff] %v92
    // Predicated region
    $region18: #{tpu_custom_call.1} parent=1 // pred_check
      _
    $region19: #{tpu_custom_call.1} parent=1 // pred_check_branch
      %95 = sbr.rel (0) target = $region21
    $region20: #{tpu_custom_call.1} parent=1 // pred_region
      %s97 = ssub.s32 128, 128
      %98 = vsyncadd [#allocation4], %s97
      %s100 = sshll.u32 [#allocation7], 4
      %s101 = int_to_ptr.vmem [resolvable:$true] %s100
      %103 = dma.vmem_to_hbm [thread:$0]  %s101, 128, %s2, [#allocation4]
    $region21: #{tpu_custom_call.1} parent=1 // pred_fallthru
      _
    // Predicated region
    $region22: #{tpu_custom_call.1} parent=1 // pred_check
      _
    $region23: #{tpu_custom_call.1} parent=1 // pred_check_branch
      %105 = sbr.rel (0) target = $region25
    $region24: #{tpu_custom_call.1} parent=1 // pred_region
      %106 = dma.done [#allocation4], 128
    $region25: #{tpu_custom_call.1} parent=1 // pred_fallthru
      _
    %107 = vsyncpa [#allocation3], 1
    %108 = vsyncpa [#allocation6], 1
    %109 = vsyncpa [#allocation4], 1

</llo_original>
